<compile_context>
chip_gen: v6e
topology: v6e:2x2x1
jax: 0.10.0
libtpu: 0.0.40
codegen_flags: <defaults>
</compile_context>

<pallas_src>
import jax
import jax.numpy as jnp
from jax.experimental import pallas as pl
from jax.experimental.pallas import tpu as pltpu

_LANE = 512            # lane-dense last dim (multiple of 128)
_MAX_TILE_ROWS = 1024  # 1024 x 512 x 4B = 2 MiB/block; x2 bufs x2 arrays = 8 MiB VMEM


def _identity_kernel(x_ref, o_ref):
    # Pure pass-through: load the VMEM tile and store it to the output tile.
    o_ref[...] = x_ref[...]


def _round_up(x, m):
    return ((x + m - 1) // m) * m


def _identity_pallas(x):
    """Identity copy of `x` through a Pallas TPU kernel (lane-dense, big tiles)."""
    orig_shape = x.shape
    orig_dtype = x.dtype
    n = x.size
    if n == 0:
        return x

    flat = x.reshape(-1)
    total_rows = pl.cdiv(n, _LANE)
    # Large row tile (sublane multiple of 8), capped so the block is portable
    # across v5e (16 MiB scoped VMEM default) / v6e / v7x (64 MiB physical).
    tile_rows = _MAX_TILE_ROWS if total_rows >= _MAX_TILE_ROWS else _round_up(total_rows, 8)
    padded_rows = _round_up(total_rows, tile_rows)
    padded_n = padded_rows * _LANE
    if padded_n != n:
        flat = jnp.concatenate(
            [flat, jnp.zeros((padded_n - n,), dtype=orig_dtype)]
        )
    x2d = flat.reshape(padded_rows, _LANE)

    grid = (padded_rows // tile_rows,)
    y2d = pl.pallas_call(
        _identity_kernel,
        out_shape=jax.ShapeDtypeStruct((padded_rows, _LANE), orig_dtype),
        grid_spec=pltpu.PrefetchScalarGridSpec(
            num_scalar_prefetch=0,
            grid=grid,
            in_specs=[pl.BlockSpec((tile_rows, _LANE), lambda i: (i, 0))],
            out_specs=pl.BlockSpec((tile_rows, _LANE), lambda i: (i, 0)),
        ),
        compiler_params=pltpu.CompilerParams(
            dimension_semantics=("parallel",),
        ),
    )(x2d)

    return y2d.reshape(-1)[:n].reshape(orig_shape)


def no_pose_correction_forward(camera, iteration, *, materialize=False):
    """JAX/Pallas equivalent of NoPoseCorrection.forward.

    Default path returns the input untouched (the module has zero math, so the
    optimal "kernel" is no kernel). Set materialize=True to route through an
    explicit Pallas identity-copy custom call.
    """
    del iteration  # unused, mirrors the PyTorch signature
    if not materialize:
        return camera, {}
    return _identity_pallas(camera), {}


def no_pose_correction_regularization(out):
    """JAX equivalent of NoPoseCorrection.regularization."""
    del out
    return {}


if __name__ == "__main__":
    key = jax.random.PRNGKey(0)
    camera = jax.random.normal(key, (2, 4, 16, 16), dtype=jnp.float32)
    iteration = 0

    # Fast (preferred) no-copy path — exact module semantics.
    out_fast, extras_fast = no_pose_correction_forward(camera, iteration)
    out_fast = jax.block_until_ready(out_fast)
    assert out_fast.shape == camera.shape and out_fast.dtype == camera.dtype
    assert extras_fast == {}
    assert jnp.array_equal(out_fast, camera)

    # Explicit Pallas identity-copy path (custom-call boundary variant).
    out_pallas, extras_pallas = no_pose_correction_forward(
        camera, iteration, materialize=True
    )
    out_pallas = jax.block_until_ready(out_pallas)
    assert out_pallas.shape == camera.shape and out_pallas.dtype == camera.dtype
    assert extras_pallas == {}
    assert jnp.array_equal(out_pallas, camera)

    # Ragged element count to exercise the pad/remainder handling (no whole-array block).
    ragged = jax.random.normal(jax.random.PRNGKey(1), (3, 5, 7, 9), dtype=jnp.float32)
    out_ragged, _ = no_pose_correction_forward(ragged, iteration, materialize=True)
    out_ragged = jax.block_until_ready(out_ragged)
    assert jnp.array_equal(out_ragged, ragged)

    assert no_pose_correction_regularization(out_pallas) == {}

    print("KERNEL_OK")
</pallas_src>

<mosaic_0001>
module attributes {stable_mosaic.version = 11 : i64} {
  func.func @_identity_kernel(%arg0: i32, %arg1: memref<8x512xf32, #tpu.memory_space<vmem>>, %arg2: memref<8x512xf32, #tpu.memory_space<vmem>>) attributes {dimension_semantics = [#tpu.dimension_semantics<parallel>], iteration_bounds = array<i64: 1>, scalar_prefetch = 0 : i64, scratch_operands = 0 : i64, tpu.core_type = #tpu.core_type<tc>, window_params = [{transform_indices = @transform_0, window_bounds = array<i64: 8, 512>}, {transform_indices = @transform_1, window_bounds = array<i64: 8, 512>}]} {
    %c0 = arith.constant 0 : index
    %c0_0 = arith.constant 0 : index
    %0 = vector.load %arg1[%c0, %c0_0] : memref<8x512xf32, #tpu.memory_space<vmem>>, vector<8x512xf32>
    %c0_1 = arith.constant 0 : index
    %c0_2 = arith.constant 0 : index
    %1 = vector.load %arg2[%c0_1, %c0_2] : memref<8x512xf32, #tpu.memory_space<vmem>>, vector<8x512xf32>
    tpu.vector_store %arg2[%c0_1, %c0_2], %0 {strides = array<i32>} : memref<8x512xf32, #tpu.memory_space<vmem>>, vector<8x512xf32>,
    return
  }
  func.func @transform_0(%arg0: i32) -> (i32, i32) {
    %c0_i32 = arith.constant 0 : i32
    %c0_i32_0 = arith.constant 0 : i32
    return %arg0, %c0_i32 : i32, i32
  }
  func.func @transform_1(%arg0: i32) -> (i32, i32) {
    %c0_i32 = arith.constant 0 : i32
    %c0_i32_0 = arith.constant 0 : i32
    return %arg0, %c0_i32 : i32, i32
  }
}

</mosaic_0001>

<llo_original>
// kernel: tpu_custom_call.1
$region0: #{tpu_custom_call.1}
  #allocation0 [shape = 'u32[]', space=smem, size = 0x4, offset = 0x4, fixed_abs, tag = 'smem constant byte address 0x4 - core index']
  #allocation1 [shape = 'u32[144,128]{1,0:T(1,128)}', space=vmem, size = 0x12000, scoped, tag = 'internal scratch']
  %s0 = inlined_call_operand.hbm [shape: f32[8,512], index: 0, kind: input, shape index: {}]
  %s1 = inlined_call_operand.hbm [shape: f32[8,512], index: 1, kind: output, shape index: {}]
  %s2 = sld [smem:[#allocation0]]
  $region18: #{tpu_custom_call.1} parent=0
    _
  %s4 = ssub.s32 1, %s2
  %s5 = scalar_select 0, %s4, %s2
  $region1: #{tpu_custom_call.1} parent=0
    #allocation2 [shape = 'u8[16384]{0}', space=vmem, size = 0x4000, scoped, tag = 'input window, operand 0, single buffered']
    #allocation3 [shape = 's32[1]{0}', space=sflag, size = 0x4, scoped, tag = 'scoped memory for tpu_custom_call.1']
    #allocation4 [shape = 's32[1]{0}', space=sflag, size = 0x4, scoped, tag = 'scoped memory for tpu_custom_call.1']
    #allocation5 [shape = 'u8[16384]{0}', space=vmem, size = 0x4000, scoped, tag = 'output window, operand 0, single buffered']
    %6 = vsyncpa [#allocation3], 0
    %7 = vsyncpa [#allocation4], 0
    // Predicated region
    $region2: #{tpu_custom_call.1} parent=1 // pred_check
      _
    $region3: #{tpu_custom_call.1} parent=1 // pred_check_branch
      %9 = sbr.rel (0) target = $region5
    $region4: #{tpu_custom_call.1} parent=1 // pred_region
      %s11 = ssub.s32 512, 512
      %12 = vsyncadd [#allocation3], %s11
      %s14 = sshll.u32 [#allocation2], 4
      %s15 = int_to_ptr.vmem [resolvable:$true] %s14
      %17 = dma.hbm_to_vmem [thread:$0]  %s0, 512, %s15, [#allocation3]
    $region5: #{tpu_custom_call.1} parent=1 // pred_fallthru
      _
    // Predicated region
    $region6: #{tpu_custom_call.1} parent=1 // pred_check
      _
    $region7: #{tpu_custom_call.1} parent=1 // pred_check_branch
      %19 = sbr.rel (0) target = $region9
    $region8: #{tpu_custom_call.1} parent=1 // pred_region
      %20 = dma.done [#allocation3], 512
    $region9: #{tpu_custom_call.1} parent=1 // pred_fallthru
      _
    %v21 = vld [vmem:[#allocation2] sm:$0xff]
    %v22 = vld [vmem:[#allocation2 + $0x8] sm:$0xff]
    %v23 = vld [vmem:[#allocation2 + $0x10] sm:$0xff]
    %v24 = vld [vmem:[#allocation2 + $0x18] sm:$0xff]
    %25 = vst [vmem:[#allocation5] sm:$0xff] %v21
    %26 = vst [vmem:[#allocation5 + $0x8] sm:$0xff] %v22
    %27 = vst [vmem:[#allocation5 + $0x10] sm:$0xff] %v23
    %28 = vst [vmem:[#allocation5 + $0x18] sm:$0xff] %v24
    // Predicated region
    $region10: #{tpu_custom_call.1} parent=1 // pred_check
      _
    $region11: #{tpu_custom_call.1} parent=1 // pred_check_branch
      %30 = sbr.rel (0) target = $region13
    $region12: #{tpu_custom_call.1} parent=1 // pred_region
      %s32 = ssub.s32 512, 512
      %33 = vsyncadd [#allocation4], %s32
      %s35 = sshll.u32 [#allocation5], 4
      %s36 = int_to_ptr.vmem [resolvable:$true] %s35
      %38 = dma.vmem_to_hbm [thread:$0]  %s36, 512, %s1, [#allocation4]
    $region13: #{tpu_custom_call.1} parent=1 // pred_fallthru
      _
    // Predicated region
    $region14: #{tpu_custom_call.1} parent=1 // pred_check
      _
    $region15: #{tpu_custom_call.1} parent=1 // pred_check_branch
      %40 = sbr.rel (0) target = $region17
    $region16: #{tpu_custom_call.1} parent=1 // pred_region
      %41 = dma.done [#allocation4], 512
    $region17: #{tpu_custom_call.1} parent=1 // pred_fallthru
      _
    %42 = vsyncpa [#allocation3], 1
    %43 = vsyncpa [#allocation4], 1

</llo_original>
